<compile_context>
chip_gen: v5e
topology: v5e:2x2
jax: 0.10.0
libtpu: 0.0.40
codegen_flags: <defaults>
</compile_context>

<pallas_src>
import jax
import jax.numpy as jnp
from jax import lax
from jax.experimental import pallas as pl
from jax.experimental.pallas import tpu as pltpu

_LANE = 128  # TPU vreg lane width


def _round_up(x, m):
    return ((x + m - 1) // m) * m


def _linear_stages_kernel(y_ref, wt_ref, b_ref, o_ref):
    # y_ref : (S, B, IN_PAD)   VMEM  (lane-padded state, S = RK stages)
    # wt_ref: (IN_PAD, OUT_PAD) VMEM  (pre-transposed, lane-padded nn.Linear weight)
    # b_ref : (1, OUT_PAD)      VMEM
    # o_ref : (S, B, OUT_PAD)   VMEM  (lane-dense -> unmasked full-vreg stores)
    w = wt_ref[...]   # loaded once, resident across all stages of this launch
    b = b_ref[...]
    n_stages = y_ref.shape[0]

    def body(s, carry):
        acc = jnp.dot(y_ref[s], w, preferred_element_type=jnp.float32)
        o_ref[s] = (acc + b).astype(o_ref.dtype)
        return carry

    # Short fixed trip-count: unroll for LLO scheduler visibility (v5e/v6e).
    lax.fori_loop(0, n_stages, body, 0, unroll=True)


def _linear_padded_call(y3d, wt_pad, b_pad):
    """One gridless pallas_call; all (tiny) operands live whole in VMEM."""
    S, B, in_pad = y3d.shape
    out_pad = wt_pad.shape[1]
    flops = 2 * S * B * in_pad * out_pad
    bytes_accessed = 4 * (S * B * in_pad + in_pad * out_pad + out_pad + S * B * out_pad)
    return pl.pallas_call(
        _linear_stages_kernel,
        out_shape=jax.ShapeDtypeStruct((S, B, out_pad), y3d.dtype),
        in_specs=[
            pl.BlockSpec(memory_space=pltpu.MemorySpace.VMEM),
            pl.BlockSpec(memory_space=pltpu.MemorySpace.VMEM),
            pl.BlockSpec(memory_space=pltpu.MemorySpace.VMEM),
        ],
        out_specs=pl.BlockSpec(memory_space=pltpu.MemorySpace.VMEM),
        cost_estimate=pl.CostEstimate(
            flops=flops, transcendentals=0, bytes_accessed=bytes_accessed),
    )(y3d, wt_pad, b_pad)


class PallasLinear:
    """nn.Linear forward with one-time parameter preparation.

    Weight is stored transposed as a full [IN_PAD, OUT_PAD] lane-padded tile
    and bias as [1, OUT_PAD]; both are built ONCE at construction.  The hot
    path `forward_padded` keeps the state lane-padded end to end (no slice,
    no reshape, padding lanes stay exactly zero).
    """

    def __init__(self, weight, bias):
        out_f, in_f = weight.shape
        assert bias.shape == (out_f,)
        self.in_features = in_f
        self.out_features = out_f
        self.in_pad = _round_up(in_f, _LANE)
        self.out_pad = _round_up(out_f, _LANE)
        self.dtype = weight.dtype

        wt = jnp.transpose(weight)  # [IN, OUT] — computed ONCE, not per call
        self.wt_pad = (
            jnp.zeros((self.in_pad, self.out_pad), weight.dtype)
            .at[:in_f, :out_f].set(wt)
        )
        self.b_pad = (
            jnp.zeros((1, self.out_pad), bias.dtype)
            .at[:, :out_f].set(bias.reshape(1, out_f))
        )

    # ---- state padding (done ONCE by the integrator, outside the step loop) ----
    def pad_state(self, y):
        assert y.shape[-1] == self.in_features, "state last dim != in_features"
        pad = self.in_pad - self.in_features
        if pad == 0:
            return y.astype(self.dtype)
        widths = [(0, 0)] * (y.ndim - 1) + [(0, pad)]
        return jnp.pad(y.astype(self.dtype), widths)

    # ---- hot path: lane-padded in, lane-padded out, zero wrapper glue ----
    def forward_padded(self, y_pad):
        assert y_pad.shape[-1] == self.in_pad, "padded state last dim != IN_PAD"
        y_pad = y_pad.astype(self.dtype)
        if y_pad.ndim == 2:  # (B, IN_PAD) -> treat as a single stage
            out = _linear_padded_call(y_pad[None], self.wt_pad, self.b_pad)
            return out[0]
        assert y_pad.ndim == 3, "padded state must be (B, IN_PAD) or (S, B, IN_PAD)"
        return _linear_padded_call(y_pad, self.wt_pad, self.b_pad)

    # ---- compatibility path with the exact PyTorch shapes ----
    def __call__(self, y):
        assert y.shape[-1] == self.in_features, "state last dim != in_features"
        lead = y.shape[:-1]
        y2d = self.pad_state(y.reshape(-1, self.in_features))
        out = _linear_padded_call(y2d[None], self.wt_pad, self.b_pad)[0]
        return out[:, : self.out_features].reshape(*lead, self.out_features)


class RemoveTimeArg:
    """JAX/Pallas port of RemoveTimeArg: forward(t, y) -> module(y)."""

    def __init__(self, module_fn):
        self._module = module_fn

    def __call__(self, t, y):
        del t  # dropping the time argument IS the module's entire behavior
        return self._module(y)


if __name__ == "__main__":
    key = jax.random.PRNGKey(0)
    k_y, k_w, k_b, k_t, k_s = jax.random.split(key, 5)

    batch, hidden, stages = 8, 32, 4

    # Deterministic synthetic parameters for the wrapped nn.Linear(hidden, hidden).
    weight = jax.random.normal(k_w, (hidden, hidden), dtype=jnp.float32) * 0.1
    bias = jax.random.normal(k_b, (hidden,), dtype=jnp.float32) * 0.1

    linear = PallasLinear(weight, bias)            # parameter prep happens here, once
    model = RemoveTimeArg(linear)                  # compat: PyTorch-shaped in/out
    model_padded = RemoveTimeArg(linear.forward_padded)  # hot path: lane-padded state

    t = jax.random.uniform(k_t, (), dtype=jnp.float32)  # ignored time argument
    y = jax.random.normal(k_y, (batch, hidden), dtype=jnp.float32)

    # --- compatibility forward (exact PyTorch shapes) ---
    fwd = jax.jit(model)
    out = jax.block_until_ready(fwd(t, y))
    ref = y @ weight.T + bias
    assert out.shape == (batch, hidden)
    assert jnp.allclose(out, ref, atol=1e-5, rtol=1e-5)

    # --- hot path: 4 stacked RK-stage states, lane-padded end-to-end,
    #     fused into ONE kernel launch with weights resident across stages ---
    y_stack = jax.random.normal(k_s, (stages, batch, hidden), dtype=jnp.float32)
    y_pad = linear.pad_state(y_stack)              # done once; integrator carries y_pad
    fwd_pad = jax.jit(model_padded)
    out_pad = jax.block_until_ready(fwd_pad(t, y_pad))
    assert out_pad.shape == (stages, batch, linear.out_pad)
    ref_stack = y_stack @ weight.T + bias
    assert jnp.allclose(out_pad[..., :hidden], ref_stack, atol=1e-5, rtol=1e-5)
    # Padding lanes are exactly zero, so the padded state can be carried forever.
    assert jnp.all(out_pad[..., hidden:] == 0)

    print("KERNEL_OK")
</pallas_src>

<mosaic_0001>
module attributes {stable_mosaic.version = 11 : i64} {
  func.func @_linear_stages_kernel(%arg0: memref<1x8x128xf32, #tpu.memory_space<vmem>>, %arg1: memref<128x128xf32, #tpu.memory_space<vmem>>, %arg2: memref<1x128xf32, #tpu.memory_space<vmem>>, %arg3: memref<1x8x128xf32, #tpu.memory_space<vmem>>) attributes {dimension_semantics = [], scalar_prefetch = 0 : i64, scratch_operands = 0 : i64, tpu.core_type = #tpu.core_type<tc>} {
    %c0 = arith.constant 0 : index
    %c0_0 = arith.constant 0 : index
    %0 = vector.load %arg1[%c0, %c0_0] : memref<128x128xf32, #tpu.memory_space<vmem>>, vector<128x128xf32>
    %c0_1 = arith.constant 0 : index
    %c0_2 = arith.constant 0 : index
    %1 = vector.load %arg2[%c0_1, %c0_2] : memref<1x128xf32, #tpu.memory_space<vmem>>, vector<1x128xf32>
    %c0_i32 = arith.constant 0 : i32
    %2 = arith.index_cast %c0_i32 : i32 to index
    %c0_3 = arith.constant 0 : index
    %c0_4 = arith.constant 0 : index
    %3 = vector.load %arg0[%2, %c0_3, %c0_4] : memref<1x8x128xf32, #tpu.memory_space<vmem>>, vector<1x8x128xf32>
    %4 = vector.shape_cast %3 : vector<1x8x128xf32> to vector<8x128xf32>
    %cst = arith.constant dense<0.000000e+00> : vector<8x128xf32>
    %5 = tpu.matmul %4, %0, %cst {dimension_numbers = #tpu.dot_dimension_numbers<[1], [0], [0], [1], [0, 0, 1, 1], [], []>} : vector<8x128xf32>, vector<128x128xf32>, vector<8x128xf32> -> vector<8x128xf32>
    %6 = vector.broadcast %1 : vector<1x128xf32> to vector<8x128xf32>
    %7 = arith.addf %5, %6 : vector<8x128xf32>
    %8 = arith.index_cast %c0_i32 : i32 to index
    %c0_5 = arith.constant 0 : index
    %c0_6 = arith.constant 0 : index
    %9 = vector.load %arg3[%8, %c0_5, %c0_6] : memref<1x8x128xf32, #tpu.memory_space<vmem>>, vector<1x8x128xf32>
    %10 = vector.shape_cast %9 : vector<1x8x128xf32> to vector<8x128xf32>
    %11 = vector.shape_cast %7 : vector<8x128xf32> to vector<1x8x128xf32>
    tpu.vector_store %arg3[%8, %c0_5, %c0_6], %11 {strides = array<i32>} : memref<1x8x128xf32, #tpu.memory_space<vmem>>, vector<1x8x128xf32>,
    %c1_i32 = arith.constant 1 : i32
    return
  }
}

</mosaic_0001>

<llo_original>
// kernel: _unnamed_function_.1
$region0: #{_unnamed_function_.1}
  #allocation0 [shape = 'u32[]', space=smem, size = 0x4, offset = 0x4, fixed_abs, tag = 'smem constant byte address 0x4 - core index']
  #allocation1 [shape = 'u32[72,128]{1,0:T(1,128)}', space=vmem, size = 0x9000, scoped, tag = 'internal scratch']
  %s0 = inlined_call_operand.vmem [shape: f32[1,8,128], index: 0, kind: input, shape index: {}]
  %s1 = inlined_call_operand.hbm [shape: f32[128,128], index: 1, kind: input, shape index: {}]
  %s2 = inlined_call_operand.vmem [shape: f32[1,128], index: 2, kind: input, shape index: {}]
  %s3 = inlined_call_operand.hbm [shape: f32[1,8,128], index: 3, kind: output, shape index: {}]
  %s4 = sld [smem:[#allocation0]]
  $region26: #{_unnamed_function_.1} parent=0
    _
  %s6 = ssub.s32 1, %s4
  %s7 = scalar_select 0, %s6, %s4
  $region1: #{_unnamed_function_.1} parent=0
    #allocation2 [shape = 'u8[65536]{0}', space=vmem, size = 0x10000, scoped, tag = 'input window, operand 1, single buffered']
    #allocation3 [shape = 's32[1]{0}', space=sflag, size = 0x4, scoped, tag = 'scoped memory for _unnamed_function_.1']
    #allocation4 [shape = 's32[1]{0}', space=sflag, size = 0x4, scoped, tag = 'scoped memory for _unnamed_function_.1']
    #allocation5 [shape = 'u8[4096]{0}', space=vmem, size = 0x1000, scoped, tag = 'output window, operand 0, single buffered']
    %8 = vsyncpa [#allocation3], 0
    %9 = vsyncpa [#allocation4], 0
    // Predicated region
    $region2: #{_unnamed_function_.1} parent=1 // pred_check
      _
    $region3: #{_unnamed_function_.1} parent=1 // pred_check_branch
      %11 = sbr.rel (0) target = $region5
    $region4: #{_unnamed_function_.1} parent=1 // pred_region
      _
    $region5: #{_unnamed_function_.1} parent=1 // pred_fallthru
      _
    // Predicated region
    $region6: #{_unnamed_function_.1} parent=1 // pred_check
      _
    $region7: #{_unnamed_function_.1} parent=1 // pred_check_branch
      %13 = sbr.rel (0) target = $region9
    $region8: #{_unnamed_function_.1} parent=1 // pred_region
      %15 = vsyncadd [#allocation3], 0
      %s16 = sshll.u32 %s1, 4
      %s17 = int_to_ptr.hbm [resolvable:$true] %s16
      %s18 = sshll.u32 [#allocation2], 4
      %s19 = int_to_ptr.vmem [resolvable:$true] %s18
      %24 = dma.hbm_to_vmem [thread:$0]  %s17, 2048, %s19, [#allocation3], 128, 128, 8
    $region9: #{_unnamed_function_.1} parent=1 // pred_fallthru
      _
    // Predicated region
    $region10: #{_unnamed_function_.1} parent=1 // pred_check
      _
    $region11: #{_unnamed_function_.1} parent=1 // pred_check_branch
      %26 = sbr.rel (0) target = $region13
    $region12: #{_unnamed_function_.1} parent=1 // pred_region
      _
    $region13: #{_unnamed_function_.1} parent=1 // pred_fallthru
      _
    // Predicated region
    $region14: #{_unnamed_function_.1} parent=1 // pred_check
      _
    $region15: #{_unnamed_function_.1} parent=1 // pred_check_branch
      %28 = sbr.rel (0) target = $region17
    $region16: #{_unnamed_function_.1} parent=1 // pred_region
      %30 = dma.done [#allocation3], 2048
    $region17: #{_unnamed_function_.1} parent=1 // pred_fallthru
      _
    %v31 = vld [vmem:[#allocation2] sm:$0xff]
    %v32 = vld [vmem:[#allocation2 + $0x8] sm:$0xff]
    %v33 = vld [vmem:[#allocation2 + $0x10] sm:$0xff]
    %v34 = vld [vmem:[#allocation2 + $0x18] sm:$0xff]
    %v35 = vld [vmem:[#allocation2 + $0x20] sm:$0xff]
    %v36 = vld [vmem:[#allocation2 + $0x28] sm:$0xff]
    %v37 = vld [vmem:[#allocation2 + $0x30] sm:$0xff]
    %v38 = vld [vmem:[#allocation2 + $0x38] sm:$0xff]
    %v39 = vld [vmem:[#allocation2 + $0x40] sm:$0xff]
    %v40 = vld [vmem:[#allocation2 + $0x48] sm:$0xff]
    %v41 = vld [vmem:[#allocation2 + $0x50] sm:$0xff]
    %v42 = vld [vmem:[#allocation2 + $0x58] sm:$0xff]
    %v43 = vld [vmem:[#allocation2 + $0x60] sm:$0xff]
    %v44 = vld [vmem:[#allocation2 + $0x68] sm:$0xff]
    %v45 = vld [vmem:[#allocation2 + $0x70] sm:$0xff]
    %v46 = vld [vmem:[#allocation2 + $0x78] sm:$0xff]
    %v47 = vld [vmem:[%s2] sm:$0x1]
    %v48 = vld [vmem:[%s0] sm:$0xff]
    %v50 = vperm.slane %v47, 0
    %52 = vmatpush.msra.mxu0 %v46
    %53 = vmatpush.msra.mxu0 %v45
    %54 = vmatpush.msra.mxu0 %v44
    %55 = vmatpush.msra.mxu0 %v43
    %56 = vmatpush.msra.mxu0 %v42
    %57 = vmatpush.msra.mxu0 %v41
    %58 = vmatpush.msra.mxu0 %v40
    %59 = vmatpush.msra.mxu0 %v39
    %60 = vmatpush.msra.mxu0 %v38
    %61 = vmatpush.msra.mxu0 %v37
    %62 = vmatpush.msra.mxu0 %v36
    %63 = vmatpush.msra.mxu0 %v35
    %64 = vmatpush.msra.mxu0 %v34
    %65 = vmatpush.msra.mxu0 %v33
    %66 = vmatpush.msra.mxu0 %v32
    %67 = vmatpush.msra.mxu0 %v31
    %68 = vmatmul.f32.gmra.mxu0 %v48
    %v69 = vpop.f32.mrf.mxu0
    %v70 = vadd.f32 %v50, %v69
    %71 = vdwg.mxu0
    %72 = vst [vmem:[#allocation5] sm:$0xff] %v70
    // Predicated region
    $region18: #{_unnamed_function_.1} parent=1 // pred_check
      _
    $region19: #{_unnamed_function_.1} parent=1 // pred_check_branch
      %74 = sbr.rel (0) target = $region21
    $region20: #{_unnamed_function_.1} parent=1 // pred_region
      %76 = vsyncadd [#allocation4], 0
      %s78 = sshll.u32 [#allocation5], 4
      %s79 = int_to_ptr.vmem [resolvable:$true] %s78
      %s80 = sshll.u32 %s3, 4
      %s81 = int_to_ptr.hbm [resolvable:$true] %s80
      %83 = dma.vmem_to_hbm [thread:$0]  %s79, 128, %s81, [#allocation4]
    $region21: #{_unnamed_function_.1} parent=1 // pred_fallthru
      _
    // Predicated region
    $region22: #{_unnamed_function_.1} parent=1 // pred_check
      _
    $region23: #{_unnamed_function_.1} parent=1 // pred_check_branch
      %85 = sbr.rel (0) target = $region25
    $region24: #{_unnamed_function_.1} parent=1 // pred_region
      %87 = dma.done [#allocation4], 128
    $region25: #{_unnamed_function_.1} parent=1 // pred_fallthru
      _
    %88 = vsyncpa [#allocation3], 1
    %89 = vsyncpa [#allocation4], 1

</llo_original>
